<compile_context>
chip_gen: v7x
topology: tpu7x:2x2x1
jax: 0.10.0
libtpu: 0.0.40
codegen_flags: <defaults>
</compile_context>

<pallas_src>
import functools

import jax
import jax.numpy as jnp
from jax.experimental import pallas as pl
from jax.experimental.pallas import tpu as pltpu


def _round_up(x, m):
    return (x + m - 1) // m * m


def _pick_tile(n_pad, cap):
    """Largest multiple of 128 that divides n_pad and is <= cap."""
    best = 128
    t = 256
    limit = min(cap, n_pad)
    while t <= limit:
        if n_pad % t == 0:
            best = t
        t += 128
    return best


def _gcn_adj_kernel(*refs, apply_w, resident_rhs, single_k, compute_dtype, tk):
    """One (row-tile i, adj-col-tile k) grid step of relu(adj @ rhs [@ W])."""
    if apply_w:
        adj_ref, rhs_ref, w_ref, o_ref = refs[:4]
        scratch = refs[4:]
    else:
        adj_ref, rhs_ref, o_ref = refs[:3]
        w_ref = None
        scratch = refs[3:]
    acc_ref = scratch[0] if scratch else None

    k = pl.program_id(1)

    a = adj_ref[...]
    if a.dtype != compute_dtype:
        a = a.astype(compute_dtype)          # per-tile VPU cast (no host copy of adj)

    if resident_rhs:
        # rhs lives fully in VMEM (single DMA); slice the k-th row block.
        rhs = rhs_ref[pl.ds(pl.multiple_of(k * tk, tk), tk), :]
    else:
        rhs = rhs_ref[...]

    part = jnp.dot(a, rhs, preferred_element_type=jnp.float32)

    def _finalize(acc):
        if apply_w:
            acc = jnp.dot(acc.astype(compute_dtype), w_ref[...],
                          preferred_element_type=jnp.float32)
        o_ref[...] = jnp.maximum(acc, 0.0).astype(o_ref.dtype)

    if single_k:
        _finalize(part)
    else:
        @pl.when(k == 0)
        def _():
            acc_ref[...] = jnp.zeros_like(acc_ref)

        acc_ref[...] += part

        @pl.when(k == pl.num_programs(1) - 1)
        def _():
            _finalize(acc_ref[...])


def graph_convolution_forward(
    x,
    adj,
    weight,
    *,
    compute_dtype=jnp.bfloat16,
    out_dtype=jnp.float32,
    tm_max=512,
    tk_max=512,
    resident_rhs_bytes=8 * 1024 * 1024,
):
    """GCN layer: relu(adj @ (x @ weight)).  dropout=0.0 -> no-op (inference)."""
    n, f_in = x.shape
    f_in2, f_out = weight.shape
    assert f_in == f_in2 and adj.shape == (n, n)

    cdt = jnp.dtype(compute_dtype)
    odt = jnp.dtype(out_dtype)

    f_in_p = _round_up(f_in, 128)
    f_out_p = _round_up(f_out, 128)
    n_pad = _round_up(n, 128)

    # (adj @ x) @ W == adj @ (x @ W).  Compare lane-padded widths (what the MXU
    # actually sees); on a tie prefer the hoisted-support path (no extra finalize
    # matmul, no resident W, no accumulator re-round).
    reassociate = f_in_p < f_out_p

    # --- tile selection ---------------------------------------------------
    # Tiles divide n_pad (no adjacency padding beyond 128-alignment); cap tm so
    # grid_m >= 2 whenever possible so both v7x TensorCores get work.
    if n_pad >= 256:
        tm_cap = min(tm_max, max(128, (n_pad // 2) // 128 * 128))
    else:
        tm_cap = tm_max
    tm = _pick_tile(n_pad, tm_cap)
    tk = _pick_tile(n_pad, tk_max)
    grid_m = n_pad // tm
    grid_k = n_pad // tk
    single_k = grid_k == 1

    # --- host-side prep (avoid materializing copies of the N^2 adjacency) --
    if n_pad == n:
        adj_p = adj                                   # passthrough; cast per-tile in-kernel
    else:
        # Padding unavoidable: cast first so the one extra HBM copy is half-width.
        adj_p = jnp.pad(adj.astype(cdt), ((0, n_pad - n), (0, n_pad - n)))

    x_c = x.astype(cdt)
    w_c = weight.astype(cdt)
    if n_pad == n and f_in_p == f_in:
        x_p = x_c
    else:
        x_p = jnp.pad(x_c, ((0, n_pad - n), (0, f_in_p - f_in)))
    if f_in_p == f_in and f_out_p == f_out:
        w_p = w_c
    else:
        w_p = jnp.pad(w_c, ((0, f_in_p - f_in), (0, f_out_p - f_out)))

    if reassociate:
        rhs_p = x_p                                   # kernel applies W in the finalize step
        rhs_cols = f_in_p
        apply_w = True
        extra_inputs = (w_p,)
    else:
        # Hoisted: support = x @ W computed once (tiny vs. the N^2 matmul).
        rhs_p = jnp.dot(x_p, w_p, preferred_element_type=jnp.float32).astype(cdt)
        rhs_cols = f_out_p
        apply_w = False
        extra_inputs = ()

    # Keep rhs (x or support) resident in VMEM when it fits: one DMA total
    # instead of grid_m re-streams.
    rhs_bytes = n_pad * rhs_cols * cdt.itemsize
    resident_rhs = (not single_k) and rhs_bytes <= resident_rhs_bytes

    adj_spec = pl.BlockSpec((tm, tk), lambda i, k: (i, k))
    if resident_rhs:
        rhs_spec = pl.BlockSpec((n_pad, rhs_cols), lambda i, k: (0, 0))
    else:
        rhs_spec = pl.BlockSpec((tk, rhs_cols), lambda i, k: (k, 0))
    in_specs = [adj_spec, rhs_spec]
    if apply_w:
        in_specs.append(pl.BlockSpec((f_in_p, f_out_p), lambda i, k: (0, 0)))
    out_spec = pl.BlockSpec((tm, f_out_p), lambda i, k: (i, 0))

    scratch_shapes = [] if single_k else [pltpu.VMEM((tm, rhs_cols), jnp.float32)]

    # --- VMEM budget (no 4x fudge), clamped to the generation's capacity ----
    adj_itemsize = jnp.dtype(adj_p.dtype).itemsize
    rhs_buf_rows = n_pad if (resident_rhs or single_k) else tk
    vmem_est = 2 * tm * tk * adj_itemsize                       # adj double buffer
    vmem_est += 2 * rhs_buf_rows * rhs_cols * cdt.itemsize      # rhs buffer(s)
    if apply_w:
        vmem_est += 2 * f_in_p * f_out_p * cdt.itemsize         # resident W
    vmem_est += 2 * tm * f_out_p * odt.itemsize                 # output double buffer
    if not single_k:
        vmem_est += tm * rhs_cols * 4                           # f32 accumulator
    try:
        vmem_cap = int(pltpu.get_tpu_info().vmem_capacity_bytes)
    except Exception:
        vmem_cap = 64 * 1024 * 1024                             # conservative (v7x)
    vmem_ceiling = min(100 * 1024 * 1024, (vmem_cap * 3) // 4)
    vmem_limit = int(min(vmem_ceiling,
                         max(16 * 1024 * 1024, int(vmem_est * 1.5) + (8 << 20))))

    # --- advisory cost estimate --------------------------------------------
    flops = 2 * n_pad * n_pad * rhs_cols
    if apply_w:
        flops += 2 * n_pad * f_in_p * f_out_p
    rhs_reads = 1 if (resident_rhs or single_k) else grid_m
    bytes_accessed = (n_pad * n_pad * adj_itemsize
                      + rhs_reads * n_pad * rhs_cols * cdt.itemsize
                      + (f_in_p * f_out_p * cdt.itemsize if apply_w else 0)
                      + n_pad * f_out_p * odt.itemsize)

    kernel = functools.partial(
        _gcn_adj_kernel,
        apply_w=apply_w,
        resident_rhs=resident_rhs,
        single_k=single_k,
        compute_dtype=cdt,
        tk=tk,
    )

    out_p = pl.pallas_call(
        kernel,
        out_shape=jax.ShapeDtypeStruct((n_pad, f_out_p), odt),
        grid_spec=pltpu.PrefetchScalarGridSpec(
            num_scalar_prefetch=0,
            grid=(grid_m, grid_k),
            in_specs=in_specs,
            out_specs=out_spec,
            scratch_shapes=scratch_shapes,
        ),
        compiler_params=pltpu.CompilerParams(
            dimension_semantics=("parallel", "arbitrary"),
            vmem_limit_bytes=vmem_limit,
        ),
        cost_estimate=pl.CostEstimate(
            flops=int(flops), transcendentals=0, bytes_accessed=int(bytes_accessed)
        ),
    )(adj_p, rhs_p, *extra_inputs)

    return out_p[:n, :f_out]


def xavier_uniform(key, shape, dtype=jnp.float32):
    fan_in, fan_out = shape
    limit = jnp.sqrt(6.0 / (fan_in + fan_out))
    return jax.random.uniform(key, shape, dtype, minval=-limit, maxval=limit)


def _reference(x, adj, weight):
    """Plain-JAX reference mirroring the kernel's bf16 rounding points."""
    f_in, f_out = weight.shape
    bf = lambda a: a.astype(jnp.bfloat16)
    adj_b, x_b, w_b = bf(adj), bf(x), bf(weight)
    if _round_up(f_in, 128) < _round_up(f_out, 128):      # reassociated path
        t = bf(jnp.dot(adj_b, x_b, preferred_element_type=jnp.float32))
        out = jnp.dot(t, w_b, preferred_element_type=jnp.float32)
    else:                                                  # hoisted-support path
        sup = bf(jnp.dot(x_b, w_b, preferred_element_type=jnp.float32))
        out = jnp.dot(adj_b, sup, preferred_element_type=jnp.float32)
    return jnp.maximum(out, 0.0)


if __name__ == "__main__":
    key = jax.random.PRNGKey(0)

    def make_inputs(k, n, fi, fo):
        k_x, k_adj, k_w = jax.random.split(k, 3)
        x = jax.random.normal(k_x, (n, fi), jnp.float32)
        # Synthetic symmetric row-normalized adjacency (dense stand-in for spmm).
        a_raw = (jax.random.uniform(k_adj, (n, n)) < 0.05).astype(jnp.float32)
        a_sym = jnp.maximum(a_raw, a_raw.T) + jnp.eye(n, dtype=jnp.float32)
        deg = jnp.sum(a_sym, axis=1, keepdims=True)
        adj = a_sym / deg
        w = xavier_uniform(k_w, (fi, fo))
        return x, adj, w

    # Coverage: single-K hoisted-support, multi-K reassociated (resident x + W finalize),
    # multi-K hoisted-support (resident support), and ragged shapes (padding path).
    configs = [(256, 64, 128), (640, 48, 256), (640, 256, 96), (300, 96, 48)]
    keys = jax.random.split(key, len(configs))

    for cfg_key, (n, fi, fo) in zip(keys, configs):
        x, adj, w = make_inputs(cfg_key, n, fi, fo)
        out = graph_convolution_forward(x, adj, w)
        jax.block_until_ready(out)
        assert out.shape == (n, fo), (out.shape, n, fo)
        ref = _reference(x, adj, w)
        assert jnp.allclose(out, ref, atol=1e-2, rtol=1e-2), (n, fi, fo)

    print("KERNEL_OK")
</pallas_src>

<mosaic_0001>
module attributes {stable_mosaic.version = 11 : i64} {
  func.func @_gcn_adj_kernel(%arg0: i32, %arg1: i32, %arg2: memref<128x256xf32, #tpu.memory_space<vmem>>, %arg3: memref<256x128xbf16, #tpu.memory_space<vmem>>, %arg4: memref<128x128xf32, #tpu.memory_space<vmem>>) attributes {dimension_semantics = [#tpu.dimension_semantics<parallel>, #tpu.dimension_semantics<arbitrary>], iteration_bounds = array<i64: 2, 1>, scalar_prefetch = 0 : i64, scratch_operands = 0 : i64, tpu.core_type = #tpu.core_type<tc>, window_params = [{transform_indices = @transform_0, window_bounds = array<i64: 128, 256>}, {transform_indices = @transform_1, window_bounds = array<i64: 256, 128>}, {transform_indices = @transform_2, window_bounds = array<i64: 128, 128>}]} {
    %c0 = arith.constant 0 : index
    %c0_0 = arith.constant 0 : index
    %0 = vector.load %arg2[%c0, %c0_0] : memref<128x256xf32, #tpu.memory_space<vmem>>, vector<128x256xf32>
    %1 = arith.truncf %0 : vector<128x256xf32> to vector<128x256xbf16>
    %c0_1 = arith.constant 0 : index
    %c0_2 = arith.constant 0 : index
    %2 = vector.load %arg3[%c0_1, %c0_2] : memref<256x128xbf16, #tpu.memory_space<vmem>>, vector<256x128xbf16>
    %cst = arith.constant dense<0.000000e+00> : vector<128x128xf32>
    %3 = tpu.matmul %1, %2, %cst {dimension_numbers = #tpu.dot_dimension_numbers<[1], [0], [0], [1], [0, 0, 1, 1], [], []>} : vector<128x256xbf16>, vector<256x128xbf16>, vector<128x128xf32> -> vector<128x128xf32>
    %cst_3 = arith.constant 0.000000e+00 : f32
    %4 = vector.broadcast %cst_3 : f32 to vector<128x128xf32>
    %5 = arith.maximumf %3, %4 : vector<128x128xf32>
    %c0_4 = arith.constant 0 : index
    %c0_5 = arith.constant 0 : index
    %6 = vector.load %arg4[%c0_4, %c0_5] : memref<128x128xf32, #tpu.memory_space<vmem>>, vector<128x128xf32>
    tpu.vector_store %arg4[%c0_4, %c0_5], %5 {strides = array<i32>} : memref<128x128xf32, #tpu.memory_space<vmem>>, vector<128x128xf32>,
    return
  }
  func.func @transform_0(%arg0: i32, %arg1: i32) -> (i32, i32) {
    %c0_i32 = arith.constant 0 : i32
    return %arg0, %arg1 : i32, i32
  }
  func.func @transform_1(%arg0: i32, %arg1: i32) -> (i32, i32) {
    %c0_i32 = arith.constant 0 : i32
    %c0_i32_0 = arith.constant 0 : i32
    return %arg1, %c0_i32 : i32, i32
  }
  func.func @transform_2(%arg0: i32, %arg1: i32) -> (i32, i32) {
    %c0_i32 = arith.constant 0 : i32
    %c0_i32_0 = arith.constant 0 : i32
    return %arg0, %c0_i32 : i32, i32
  }
}

</mosaic_0001>

<llo_original>
// kernel: tpu_custom_call.1
$region0: #{tpu_custom_call.1}
  #allocation0 [shape = 'u32[]', space=smem, size = 0x4, offset = 0x4, fixed_abs, tag = 'smem constant byte address 0x4 - core index']
  #allocation1 [shape = 'u32[144,128]{1,0:T(1,128)}', space=vmem, size = 0x12000, scoped, tag = 'internal scratch']
  %s0 = inlined_call_operand.hbm [shape: f32[256,256], index: 0, kind: input, shape index: {}]
  %s1 = inlined_call_operand.hbm [shape: bf16[256,128], index: 1, kind: input, shape index: {}]
  %s2 = inlined_call_operand.hbm [shape: f32[256,128], index: 2, kind: output, shape index: {}]
  %s3 = sld [smem:[#allocation0]]
  $region49: #{tpu_custom_call.1} parent=0
    _
  %s5 = ssub.s32 1, %s3
  %s6 = scalar_select 0, %s5, %s3
  $region1: #{tpu_custom_call.1} parent=0
    #allocation2 [shape = 'u8[262144]{0}', space=vmem, size = 0x40000, scoped, tag = 'input window, operand 0']
    #allocation3 [shape = 's32[2]{0}', space=sflag, size = 0x8, scoped, tag = 'scoped memory for tpu_custom_call.1']
    #allocation4 [shape = 's32[2]{0}', space=sflag, size = 0x8, scoped, tag = 'scoped memory for tpu_custom_call.1']
    #allocation5 [shape = 'u8[65536]{0}', space=vmem, size = 0x10000, scoped, tag = 'input window, operand 1, single buffered']
    #allocation6 [shape = 's32[1]{0}', space=sflag, size = 0x4, scoped, tag = 'scoped memory for tpu_custom_call.1']
    #allocation7 [shape = 'u8[131072]{0}', space=vmem, size = 0x20000, scoped, tag = 'output window, operand 0']
    %7 = vsyncpa [#allocation3], 0
    %s8 = scalar_lea.sflag [#allocation3], 1
    %9 = vsyncpa %s8, 0
    %10 = vsyncpa [#allocation6], 0
    %11 = vsyncpa [#allocation4], 0
    %s12 = scalar_lea.sflag [#allocation4], 1
    %13 = vsyncpa %s12, 0
    loop: start=0, step=1, limit=4
    $region2: #{tpu_custom_call.1} parent=1 // loop_pre_header
      _
    $region3: #{tpu_custom_call.1} parent=1 // loop_header
      %s15 = sphi 0, %s19
      %p16 = scmp.ge.s32.totalorder %s15, 4
      %s22 = sphi 0, %s34
      %s23 = sphi 0, %s30
      %s24 = sphi 0, %s22
      %s25 = sphi 0, %s23
      %s26 = sphi 0, %s24
      %s27 = sphi 0, %s25
      %s39 = sphi 0, %s41
      %s42 = sphi 0, %s39
      %s43 = sphi 0, %s42
      %s59 = sphi 0, %s43
      %s65 = sphi 0, %s67
      %s68 = sphi 0, %s65
      %s69 = sphi 0, %s68
      %s85 = sphi 0, %s69
      %s91 = sphi 0, %s93
      %s94 = sphi 0, %s91
      %s95 = sphi 0, %s94
      %s111 = sphi 0, %s95
    $region4: #{tpu_custom_call.1} parent=1 // loop_header_branch
      %18 = sbr.rel (%p16) target = $region8
    $region5: #{tpu_custom_call.1} parent=1 // loop_body
      %s20 = ssub.s32 %s15, 1
      %s21 = ssub.s32 %s15, 2
      %s28 = sadd.s32 1, %s23
      %p29 = scmp.ge.s32.totalorder %s28, 1
      %s30 = scalar_select %p29, 0, %s28
      %s31 = sadd.s32 1, %s22
      %s32 = scalar_select %p29, %s31, %s22
      %p33 = scmp.ge.s32.totalorder %s32, 2
      %s34 = scalar_select %p33, 0, %s32
      %s35 = ssub.s32 %s22, %s34
      %s36 = ssub.s32 %s23, %s30
      %s37 = sor.u32 %s35, %s36
      %p38 = scmp.eq.s32.totalorder %s37, 0
      %s40 = sadd.s32 %s39, 1
      %s41 = scalar_select %p38, %s39, %s40
      %p44 = pneg %p38
      %p45 = scmp.eq.s32.totalorder %s15, 1
      %p46 = por %p44, %p45
      %p47 = scmp.ne.s32.totalorder %s39, %s42
      %p48 = scmp.eq.s32.totalorder %s15, 0
      %p49 = por %p47, %p48
      %p50 = scmp.ne.s32.totalorder %s39, %s42
      %p51 = scmp.eq.s32.totalorder %s20, 1
      %p52 = por %p50, %p51
      %p53 = scmp.ne.s32.totalorder %s42, %s43
      %p54 = scmp.eq.s32.totalorder %s20, 0
      %p55 = por %p53, %p54
      %p56 = scmp.ne.s32.totalorder %s42, %s43
      %p57 = scmp.eq.s32.totalorder %s21, 1
      %p58 = por %p56, %p57
      %p60 = scmp.ne.s32.totalorder %s43, %s59
      %p61 = scmp.eq.s32.totalorder %s21, 0
      %p62 = por %p60, %p61
      %s63 = ssub.s32 %s23, %s30
      %p64 = scmp.eq.s32.totalorder %s63, 0
      %s66 = sadd.s32 %s65, 1
      %s67 = scalar_select %p64, %s65, %s66
      %p70 = pneg %p64
      %p71 = scmp.eq.s32.totalorder %s15, 1
      %p72 = por %p70, %p71
      %p73 = scmp.ne.s32.totalorder %s65, %s68
      %p74 = scmp.eq.s32.totalorder %s15, 0
      %p75 = por %p73, %p74
      %p76 = scmp.ne.s32.totalorder %s65, %s68
      %p77 = scmp.eq.s32.totalorder %s20, 1
      %p78 = por %p76, %p77
      %p79 = scmp.ne.s32.totalorder %s68, %s69
      %p80 = scmp.eq.s32.totalorder %s20, 0
      %p81 = por %p79, %p80
      %p82 = scmp.ne.s32.totalorder %s68, %s69
      %p83 = scmp.eq.s32.totalorder %s21, 1
      %p84 = por %p82, %p83
      %p86 = scmp.ne.s32.totalorder %s69, %s85
      %p87 = scmp.eq.s32.totalorder %s21, 0
      %p88 = por %p86, %p87
      %s89 = ssub.s32 %s22, %s34
      %p90 = scmp.eq.s32.totalorder %s89, 0
      %s92 = sadd.s32 %s91, 1
      %s93 = scalar_select %p90, %s91, %s92
      %p96 = pneg %p90
      %p97 = scmp.eq.s32.totalorder %s15, 1
      %p98 = por %p96, %p97
      %p99 = scmp.ne.s32.totalorder %s91, %s94
      %p100 = scmp.eq.s32.totalorder %s15, 0
      %p101 = por %p99, %p100
      %p102 = scmp.ne.s32.totalorder %s91, %s94
      %p103 = scmp.eq.s32.totalorder %s20, 1
      %p104 = por %p102, %p103
      %p105 = scmp.ne.s32.totalorder %s94, %s95
      %p106 = scmp.eq.s32.totalorder %s20, 0
      %p107 = por %p105, %p106
      %p108 = scmp.ne.s32.totalorder %s94, %s95
      %p109 = scmp.eq.s32.totalorder %s21, 1
      %p110 = por %p108, %p109
      %p112 = scmp.ne.s32.totalorder %s95, %s111
      %p113 = scmp.eq.s32.totalorder %s21, 0
      %p114 = por %p112, %p113
      %p115 = scmp.le.s32.totalorder 1, %s15
      %p116 = scmp.lt.s32.totalorder %s15, 3
      %p117 = pnand %p115, %p116
      %p118 = pneg %p117
      // Predicated region
      $region9: #{tpu_custom_call.1} parent=5 // pred_check
        _
      $region10: #{tpu_custom_call.1} parent=5 // pred_check_branch
        %120 = sbr.rel (%p117) target = $region12
      $region11: #{tpu_custom_call.1} parent=5 // pred_region
        %s121 = ssub.s32 %s15, 1
        // Predicated region
        $region13: #{tpu_custom_call.1} parent=11 // pred_check
          %p122 = pneg %p81
        $region14: #{tpu_custom_call.1} parent=11 // pred_check_branch
          %124 = sbr.rel (%p122) target = $region16
        $region15: #{tpu_custom_call.1} parent=11 // pred_region
          %s125 = smul.u32 32, %s25
          %s127 = ssub.s32 2048, 2048
          %128 = vsyncadd [#allocation6], %s127
          %s129 = smul.addr %s125, 64
          %s130 = scalar_lea.hbm %s1, %s129
          %s131 = sshll.u32 [#allocation5], 4
          %s132 = int_to_ptr.vmem [resolvable:$true] %s131
          %137 = dma.hbm_to_vmem [thread:$0]  %s130, 2048, %s132, [#allocation6], 64, 64, 4
        $region16: #{tpu_custom_call.1} parent=11 // pred_fallthru
          _
      $region12: #{tpu_custom_call.1} parent=5 // pred_fallthru
        _
      %p138 = scmp.lt.s32.totalorder %s15, 2
      // Predicated region
      $region17: #{tpu_custom_call.1} parent=5 // pred_check
        %p139 = pneg %p138
      $region18: #{tpu_custom_call.1} parent=5 // pred_check_branch
        %141 = sbr.rel (%p139) target = $region20
      $region19: #{tpu_custom_call.1} parent=5 // pred_region
        // Predicated region
        $region21: #{tpu_custom_call.1} parent=19 // pred_check
          %p142 = pneg %p49
        $region22: #{tpu_custom_call.1} parent=19 // pred_check_branch
          %144 = sbr.rel (%p142) target = $region24
        $region23: #{tpu_custom_call.1} parent=19 // pred_region
          %s145 = sand.u32 %s39, 1
          %s146 = scalar_lea.sflag [#allocation3], %s145
          %s147 = sand.u32 %s39, 1
          %s148 = smul.addr %s147, 256
          %s149 = scalar_lea.vmem [#allocation2], %s148
          %s150 = smul.u32 16, %s22
          %s151 = smul.u32 2, %s23
          %s153 = ssub.s32 4096, 4096
          %154 = vsyncadd %s146, %s153
          %s155 = smul.addr %s150, 2
          %s156 = sadd.s32 %s151, %s155
          %s157 = smul.addr %s156, 128
          %s158 = scalar_lea.hbm %s0, %s157
          %s159 = sshll.u32 %s149, 4
          %s160 = int_to_ptr.vmem [resolvable:$true] %s159
          %165 = dma.hbm_to_vmem [thread:$0]  %s158, 4096, %s160, %s146, 256, 256, 16
        $region24: #{tpu_custom_call.1} parent=19 // pred_fallthru
          _
      $region20: #{tpu_custom_call.1} parent=5 // pred_fallthru
        _
      %p166 = scmp.le.s32.totalorder 1, %s15
      %p167 = scmp.lt.s32.totalorder %s15, 3
      %p168 = pnand %p166, %p167
      %p169 = pneg %p168
      // Predicated region
      $region25: #{tpu_custom_call.1} parent=5 // pred_check
        _
      $region26: #{tpu_custom_call.1} parent=5 // pred_check_branch
        %171 = sbr.rel (%p168) target = $region28
      $region27: #{tpu_custom_call.1} parent=5 // pred_region
        %s172 = ssub.s32 %s15, 1
        %s173 = sand.u32 %s42, 1
        %s174 = scalar_lea.sflag [#allocation3], %s173
        %s175 = sand.u32 %s42, 1
        %s176 = smul.addr %s175, 256
        %s177 = scalar_lea.vmem [#allocation2], %s176
        // Predicated region
        $region29: #{tpu_custom_call.1} parent=27 // pred_check
          %p178 = pneg %p55
        $region30: #{tpu_custom_call.1} parent=27 // pred_check_branch
          %180 = sbr.rel (%p178) target = $region32
        $region31: #{tpu_custom_call.1} parent=27 // pred_region
          %181 = dma.done %s174, 4096
        $region32: #{tpu_custom_call.1} parent=27 // pred_fallthru
          _
        // Predicated region
        $region33: #{tpu_custom_call.1} parent=27 // pred_check
          %p182 = pneg %p81
        $region34: #{tpu_custom_call.1} parent=27 // pred_check_branch
          %184 = sbr.rel (%p182) target = $region36
        $region35: #{tpu_custom_call.1} parent=27 // pred_region
          %185 = dma.done [#allocation6], 2048
        $region36: #{tpu_custom_call.1} parent=27 // pred_fallthru
          _
        %s186 = sand.u32 %s42, 1
        %s187 = scalar_lea.sflag [#allocation3], %s186
        %s188 = sand.u32 %s42, 1
        %s189 = smul.addr %s188, 256
        %s190 = scalar_lea.vmem [#allocation2], %s189
        %p191 = pneg %p55
        %p192 = pneg %p52
        %p193 = pneg %p81
        %p194 = pneg %p78
        %p195 = pneg %p107
        %p196 = pneg %p104
        %s197 = sand.u32 %s94, 1
        %s198 = scalar_lea.sflag [#allocation4], %s197
        %s199 = sand.u32 %s94, 1
        %s200 = smul.addr %s199, 128
        %s201 = scalar_lea.vmem [#allocation7], %s200
        %s202 = smul.u32 16, %s24
        %s203 = smul.u32 2, %s25
        %s204 = smul.u32 32, %s25
        %s205 = smul.u32 16, %s24
        %v207 = vld [vmem:[%s177] sm:$0xff]
        %v208 = vld [vmem:[%s177 + $0x8] sm:$0xff]
        %v209 = vld [vmem:[%s177 + $0x10] sm:$0xff]
        %v210 = vld [vmem:[%s177 + $0x18] sm:$0xff]
        %v211 = vld [vmem:[%s177 + $0x20] sm:$0xff]
        %v212 = vld [vmem:[%s177 + $0x28] sm:$0xff]
        %v213 = vld [vmem:[%s177 + $0x30] sm:$0xff]
        %v214 = vld [vmem:[%s177 + $0x38] sm:$0xff]
        %v215 = vld [vmem:[%s177 + $0x40] sm:$0xff]
        %v216 = vld [vmem:[%s177 + $0x48] sm:$0xff]
        %v217 = vld [vmem:[%s177 + $0x50] sm:$0xff]
        %v218 = vld [vmem:[%s177 + $0x58] sm:$0xff]
        %v219 = vld [vmem:[%s177 + $0x60] sm:$0xff]
        %v220 = vld [vmem:[%s177 + $0x68] sm:$0xff]
        %v221 = vld [vmem:[%s177 + $0x70] sm:$0xff]
        %v222 = vld [vmem:[%s177 + $0x78] sm:$0xff]
        %v223 = vld [vmem:[%s177 + $0x80] sm:$0xff]
        %v224 = vld [vmem:[%s177 + $0x88] sm:$0xff]
        %v225 = vld [vmem:[%s177 + $0x90] sm:$0xff]
        %v226 = vld [vmem:[%s177 + $0x98] sm:$0xff]
        %v227 = vld [vmem:[%s177 + $0xa0] sm:$0xff]
        %v228 = vld [vmem:[%s177 + $0xa8] sm:$0xff]
        %v229 = vld [vmem:[%s177 + $0xb0] sm:$0xff]
        %v230 = vld [vmem:[%s177 + $0xb8] sm:$0xff]
        %v231 = vld [vmem:[%s177 + $0xc0] sm:$0xff]
        %v232 = vld [vmem:[%s177 + $0xc8] sm:$0xff]
        %v233 = vld [vmem:[%s177 + $0xd0] sm:$0xff]
        %v234 = vld [vmem:[%s177 + $0xd8] sm:$0xff]
        %v235 = vld [vmem:[%s177 + $0xe0] sm:$0xff]
        %v236 = vld [vmem:[%s177 + $0xe8] sm:$0xff]
        %v237 = vld [vmem:[%s177 + $0xf0] sm:$0xff]
        %v238 = vld [vmem:[%s177 + $0xf8] sm:$0xff]
        %v239 = vpack.c.bf16 %v209, %v207
        %v240 = vpack.c.bf16 %v210, %v208
        %v241 = vpack.c.bf16 %v213, %v211
        %v242 = vpack.c.bf16 %v214, %v212
        %v243 = vpack.c.bf16 %v217, %v215
        %v244 = vpack.c.bf16 %v218, %v216
        %v245 = vpack.c.bf16 %v221, %v219
        %v246 = vpack.c.bf16 %v222, %v220
        %v247 = vpack.c.bf16 %v225, %v223
        %v248 = vpack.c.bf16 %v226, %v224
        %v249 = vpack.c.bf16 %v229, %v227
        %v250 = vpack.c.bf16 %v230, %v228
        %v251 = vpack.c.bf16 %v233, %v231
        %v252 = vpack.c.bf16 %v234, %v232
        %v253 = vpack.c.bf16 %v237, %v235
        %v254 = vpack.c.bf16 %v238, %v236
        %v255 = vld [vmem:[#allocation5] sm:$0xf]
        %v256 = vld [vmem:[#allocation5 + $0x4] sm:$0xf]
        %v257 = vld [vmem:[#allocation5 + $0x8] sm:$0xf]
        %v258 = vld [vmem:[#allocation5 + $0xc] sm:$0xf]
        %v259 = vld [vmem:[#allocation5 + $0x10] sm:$0xf]
        %v260 = vld [vmem:[#allocation5 + $0x14] sm:$0xf]
        %v261 = vld [vmem:[#allocation5 + $0x18] sm:$0xf]
        %v262 = vld [vmem:[#allocation5 + $0x1c] sm:$0xf]
        %v263 = vld [vmem:[#allocation5 + $0x20] sm:$0xf]
        %v264 = vld [vmem:[#allocation5 + $0x24] sm:$0xf]
        %v265 = vld [vmem:[#allocation5 + $0x28] sm:$0xf]
        %v266 = vld [vmem:[#allocation5 + $0x2c] sm:$0xf]
        %v267 = vld [vmem:[#allocation5 + $0x30] sm:$0xf]
        %v268 = vld [vmem:[#allocation5 + $0x34] sm:$0xf]
        %v269 = vld [vmem:[#allocation5 + $0x38] sm:$0xf]
        %v270 = vld [vmem:[#allocation5 + $0x3c] sm:$0xf]
        %v271 = vld [vmem:[#allocation5 + $0x40] sm:$0xf]
        %v272 = vld [vmem:[#allocation5 + $0x44] sm:$0xf]
        %v273 = vld [vmem:[#allocation5 + $0x48] sm:$0xf]
        %v274 = vld [vmem:[#allocation5 + $0x4c] sm:$0xf]
        %v275 = vld [vmem:[#allocation5 + $0x50] sm:$0xf]
        %v276 = vld [vmem:[#allocation5 + $0x54] sm:$0xf]
        %v277 = vld [vmem:[#allocation5 + $0x58] sm:$0xf]
        %v278 = vld [vmem:[#allocation5 + $0x5c] sm:$0xf]
        %v279 = vld [vmem:[#allocation5 + $0x60] sm:$0xf]
        %v280 = vld [vmem:[#allocation5 + $0x64] sm:$0xf]
        %v281 = vld [vmem:[#allocation5 + $0x68] sm:$0xf]
        %v282 = vld [vmem:[#allocation5 + $0x6c] sm:$0xf]
        %v283 = vld [vmem:[#allocation5 + $0x70] sm:$0xf]
        %v284 = vld [vmem:[#allocation5 + $0x74] sm:$0xf]
        %v285 = vld [vmem:[#allocation5 + $0x78] sm:$0xf]
        %v286 = vld [vmem:[#allocation5 + $0x7c] sm:$0xf]
        %v319 = vunpack.c.l.b16 %v255
        %v320 = vunpack.c.l.b16 %v256
        %v321 = vunpack.c.l.b16 %v257
        %v322 = vunpack.c.l.b16 %v258
        %v323 = vunpack.c.l.b16 %v259
        %v324 = vunpack.c.l.b16 %v260
        %v325 = vunpack.c.l.b16 %v261
        %v326 = vunpack.c.l.b16 %v262
        %v327 = vunpack.c.l.b16 %v263
        %v328 = vunpack.c.l.b16 %v264
        %v329 = vunpack.c.l.b16 %v265
        %v330 = vunpack.c.l.b16 %v266
        %v331 = vunpack.c.l.b16 %v267
        %v332 = vunpack.c.l.b16 %v268
        %v333 = vunpack.c.l.b16 %v269
        %v334 = vunpack.c.l.b16 %v270
        %v335 = vunpack.c.l.b16 %v271
        %v336 = vunpack.c.l.b16 %v272
        %v337 = vunpack.c.l.b16 %v273
        %v338 = vunpack.c.l.b16 %v274
        %v339 = vunpack.c.l.b16 %v275
        %v340 = vunpack.c.l.b16 %v276
        %v341 = vunpack.c.l.b16 %v277
        %v342 = vunpack.c.l.b16 %v278
        %v343 = vunpack.c.l.b16 %v279
        %v344 = vunpack.c.l.b16 %v280
        %v345 = vunpack.c.l.b16 %v281
        %v346 = vunpack.c.l.b16 %v282
        %v347 = vunpack.c.l.b16 %v283
        %v348 = vunpack.c.l.b16 %v284
        %v349 = vunpack.c.l.b16 %v285
        %v350 = vunpack.c.l.b16 %v286
        %v351 = vpack.c.b16 %v320, %v319
        %v352 = vpack.c.b16 %v322, %v321
        %v353 = vpack.c.b16 %v324, %v323
        %v354 = vpack.c.b16 %v326, %v325
        %v355 = vpack.c.b16 %v328, %v327
        %v356 = vpack.c.b16 %v330, %v329
        %v357 = vpack.c.b16 %v332, %v331
        %v358 = vpack.c.b16 %v334, %v333
        %v359 = vpack.c.b16 %v336, %v335
        %v360 = vpack.c.b16 %v338, %v337
        %v361 = vpack.c.b16 %v340, %v339
        %v362 = vpack.c.b16 %v342, %v341
        %v363 = vpack.c.b16 %v344, %v343
        %v364 = vpack.c.b16 %v346, %v345
        %v365 = vpack.c.b16 %v348, %v347
        %v366 = vpack.c.b16 %v350, %v349
        %383 = vmatprep.subr.bf16.mxu0 0
        %384 = vmatpush1.bf16.msra.mxu0 %v351
        %385 = vmatprep.subr.bf16.mxu0 0
        %386 = vmatpush1.bf16.msra.mxu0 %v352
        %387 = vmatprep.subr.bf16.mxu0 0
        %388 = vmatpush1.bf16.msra.mxu0 %v353
        %389 = vmatprep.subr.bf16.mxu0 0
        %390 = vmatpush1.bf16.msra.mxu0 %v354
        %391 = vmatprep.subr.bf16.mxu0 0
        %392 = vmatpush1.bf16.msra.mxu0 %v355
        %393 = vmatprep.subr.bf16.mxu0 0
        %394 = vmatpush1.bf16.msra.mxu0 %v356
        %395 = vmatprep.subr.bf16.mxu0 0
        %396 = vmatpush1.bf16.msra.mxu0 %v357
        %397 = vmatprep.subr.bf16.mxu0 0
        %398 = vmatpush1.bf16.msra.mxu0 %v358
        %399 = vmatprep.subr.bf16.mxu0 0
        %400 = vmatpush1.bf16.msra.mxu0 %v359
        %401 = vmatprep.subr.bf16.mxu0 0
        %402 = vmatpush1.bf16.msra.mxu0 %v360
        %403 = vmatprep.subr.bf16.mxu0 0
        %404 = vmatpush1.bf16.msra.mxu0 %v361
        %405 = vmatprep.subr.bf16.mxu0 0
        %406 = vmatpush1.bf16.msra.mxu0 %v362
        %407 = vmatprep.subr.bf16.mxu0 0
        %408 = vmatpush1.bf16.msra.mxu0 %v363
        %409 = vmatprep.subr.bf16.mxu0 0
        %410 = vmatpush1.bf16.msra.mxu0 %v364
        %411 = vmatprep.subr.bf16.mxu0 0
        %412 = vmatpush1.bf16.msra.mxu0 %v365
        %413 = vmatprep.subr.bf16.mxu0 0
        %414 = vmatpush1.bf16.msra.mxu0 %v366
        %415 = vmatprep.mubr.bf16.mxu0 %v240
        %416 = vmatmul.mubr.bf16.gmra.mrb[0].mxu0 %v239
        %v417 = vpop.f32.mrb[0].mxu0
        %v418 = vadd.f32 0.0, %v417
        %v419 = vpop.f32.mrb[0].mxu0
        %v420 = vpop.f32.mrb[0].mxu0
        %v421 = vadd.f32 0.0, %v420
        %v422 = vpop.f32.mrb[0].mxu0
        %423 = vmatprep.mubr.bf16.mxu0 %v242
        %424 = vmatmul.mubr.bf16.gmra.mrb[0].mxu0 %v241
        %v425 = vpop.f32.mrb[0].mxu0
        %v426 = vadd.f32 0.0, %v425
        %v427 = vpop.f32.mrb[0].mxu0
        %v428 = vpop.f32.mrb[0].mxu0
        %v429 = vadd.f32 0.0, %v428
        %v430 = vpop.f32.mrb[0].mxu0
        %431 = vmatprep.mubr.bf16.mxu0 %v244
        %432 = vmatmul.mubr.bf16.gmra.mrb[0].mxu0 %v243
        %v433 = vpop.f32.mrb[0].mxu0
        %v434 = vadd.f32 0.0, %v433
        %v435 = vpop.f32.mrb[0].mxu0
        %v436 = vpop.f32.mrb[0].mxu0
        %v437 = vadd.f32 0.0, %v436
        %v438 = vpop.f32.mrb[0].mxu0
        %439 = vmatprep.mubr.bf16.mxu0 %v246
        %440 = vmatmul.mubr.bf16.gmra.mrb[0].mxu0 %v245
        %v441 = vpop.f32.mrb[0].mxu0
        %v442 = vadd.f32 0.0, %v441
        %v443 = vpop.f32.mrb[0].mxu0
        %v444 = vpop.f32.mrb[0].mxu0
        %v445 = vadd.f32 0.0, %v444
        %v446 = vpop.f32.mrb[0].mxu0
        %447 = vmatprep.mubr.bf16.mxu0 %v248
        %448 = vmatmul.mubr.bf16.gmra.mrb[0].mxu0 %v247
        %v449 = vpop.f32.mrb[0].mxu0
        %v450 = vadd.f32 0.0, %v449
        %v451 = vpop.f32.mrb[0].mxu0
        %v452 = vpop.f32.mrb[0].mxu0
        %v453 = vadd.f32 0.0, %v452
        %v454 = vpop.f32.mrb[0].mxu0
        %455 = vmatprep.mubr.bf16.mxu0 %v250
        %456 = vmatmul.mubr.bf16.gmra.mrb[0].mxu0 %v249
        %v457 = vpop.f32.mrb[0].mxu0
        %v458 = vadd.f32 0.0, %v457
        %v459 = vpop.f32.mrb[0].mxu0
        %v460 = vpop.f32.mrb[0].mxu0
        %v461 = vadd.f32 0.0, %v460
        %v462 = vpop.f32.mrb[0].mxu0
        %463 = vmatprep.mubr.bf16.mxu0 %v252
        %464 = vmatmul.mubr.bf16.gmra.mrb[0].mxu0 %v251
        %v465 = vpop.f32.mrb[0].mxu0
        %v466 = vadd.f32 0.0, %v465
        %v467 = vpop.f32.mrb[0].mxu0
        %v468 = vpop.f32.mrb[0].mxu0
        %v469 = vadd.f32 0.0, %v468
        %v470 = vpop.f32.mrb[0].mxu0
        %471 = vmatprep.mubr.bf16.mxu0 %v254
        %472 = vmatmul.mubr.bf16.gmra.mrb[0].mxu0 %v253
        %v473 = vpop.f32.mrb[0].mxu0
        %v474 = vadd.f32 0.0, %v473
        %v475 = vpop.f32.mrb[0].mxu0
        %v476 = vpop.f32.mrb[0].mxu0
        %v477 = vadd.f32 0.0, %v476
        %v478 = vpop.f32.mrb[0].mxu0
        %479 = vdwg.mxu0
        %v480 = vmax.f32 %v418, 0.0
        %v481 = vmax.f32 %v421, 0.0
        %v482 = vmax.f32 %v426, 0.0
        %v483 = vmax.f32 %v429, 0.0
        %v484 = vmax.f32 %v434, 0.0
        %v485 = vmax.f32 %v437, 0.0
        %v486 = vmax.f32 %v442, 0.0
        %v487 = vmax.f32 %v445, 0.0
        %v488 = vmax.f32 %v450, 0.0
        %v489 = vmax.f32 %v453, 0.0
        %v490 = vmax.f32 %v458, 0.0
        %v491 = vmax.f32 %v461, 0.0
        %v492 = vmax.f32 %v466, 0.0
        %v493 = vmax.f32 %v469, 0.0
        %v494 = vmax.f32 %v474, 0.0
        %v495 = vmax.f32 %v477, 0.0
        %496 = vst [vmem:[%s201] sm:$0xff] %v480
        %497 = vst [vmem:[%s201 + $0x8] sm:$0xff] %v481
        %498 = vst [vmem:[%s201 + $0x10] sm:$0xff] %v482
        %499 = vst [vmem:[%s201 + $0x18] sm:$0xff] %v483
        %500 = vst [vmem:[%s201 + $0x20] sm:$0xff] %v484
        %501 = vst [vmem:[%s201 + $0x28] sm:$0xff] %v485
        %502 = vst [vmem:[%s201 + $0x30] sm:$0xff] %v486
        %503 = vst [vmem:[%s201 + $0x38] sm:$0xff] %v487
        %504 = vst [vmem:[%s201 + $0x40] sm:$0xff] %v488
        %505 = vst [vmem:[%s201 + $0x48] sm:$0xff] %v489
        %506 = vst [vmem:[%s201 + $0x50] sm:$0xff] %v490
        %507 = vst [vmem:[%s201 + $0x58] sm:$0xff] %v491
        %508 = vst [vmem:[%s201 + $0x60] sm:$0xff] %v492
        %509 = vst [vmem:[%s201 + $0x68] sm:$0xff] %v493
        %510 = vst [vmem:[%s201 + $0x70] sm:$0xff] %v494
        %511 = vst [vmem:[%s201 + $0x78] sm:$0xff] %v495
        %s512 = sand.u32 %s94, 1
        %s513 = scalar_lea.sflag [#allocation4], %s512
        %s514 = sand.u32 %s94, 1
        %s515 = smul.addr %s514, 128
        %s516 = scalar_lea.vmem [#allocation7], %s515
        // Predicated region
        $region37: #{tpu_custom_call.1} parent=27 // pred_check
          %p517 = pneg %p104
        $region38: #{tpu_custom_call.1} parent=27 // pred_check_branch
          %519 = sbr.rel (%p517) target = $region40
        $region39: #{tpu_custom_call.1} parent=27 // pred_region
          %s520 = smul.u32 16, %s24
          %s522 = ssub.s32 2048, 2048
          %523 = vsyncadd %s513, %s522
          %s524 = smul.addr %s520, 128
          %s525 = scalar_lea.hbm %s2, %s524
          %s526 = sshll.u32 %s516, 4
          %s527 = int_to_ptr.vmem [resolvable:$true] %s526
          %532 = dma.vmem_to_hbm [thread:$0]  %s527, 2048, %s525, %s513, 128, 128, 8
        $region40: #{tpu_custom_call.1} parent=27 // pred_fallthru
          _
      $region28: #{tpu_custom_call.1} parent=5 // pred_fallthru
        _
      %p533 = scmp.le.s32.totalorder 2, %s15
      // Predicated region
      $region41: #{tpu_custom_call.1} parent=5 // pred_check
        %p534 = pneg %p533
      $region42: #{tpu_custom_call.1} parent=5 // pred_check_branch
        %536 = sbr.rel (%p534) target = $region44
      $region43: #{tpu_custom_call.1} parent=5 // pred_region
        %s537 = ssub.s32 %s15, 2
        // Predicated region
        $region45: #{tpu_custom_call.1} parent=43 // pred_check
          %p538 = pneg %p110
        $region46: #{tpu_custom_call.1} parent=43 // pred_check_branch
          %540 = sbr.rel (%p538) target = $region48
        $region47: #{tpu_custom_call.1} parent=43 // pred_region
          %s541 = sand.u32 %s95, 1
          %s542 = scalar_lea.sflag [#allocation4], %s541
          %s543 = sand.u32 %s95, 1
          %s544 = smul.addr %s543, 128
          %s545 = scalar_lea.vmem [#allocation7], %s544
          %546 = dma.done %s542, 2048
        $region48: #{tpu_custom_call.1} parent=43 // pred_fallthru
          _
      $region44: #{tpu_custom_call.1} parent=5 // pred_fallthru
        _
    $region6: #{tpu_custom_call.1} parent=1 // loop_footer
      %s19 = sadd.s32 1, %s15
    $region7: #{tpu_custom_call.1} parent=1 // loop_footer_branch
      %14 = sbr.rel target = $region3
    $region8: #{tpu_custom_call.1} parent=1 // loop_exit
      _
    %547 = vsyncpa [#allocation3], 1
    %s548 = scalar_lea.sflag [#allocation3], 1
    %549 = vsyncpa %s548, 1
    %550 = vsyncpa [#allocation6], 1
    %551 = vsyncpa [#allocation4], 1
    %s552 = scalar_lea.sflag [#allocation4], 1
    %553 = vsyncpa %s552, 1

</llo_original>
